<compile_context>
chip_gen: v5e
topology: v5e:2x2
jax: 0.10.0
libtpu: 0.0.40
codegen_flags: <defaults>
</compile_context>

<pallas_src>
from functools import partial

import jax
import jax.numpy as jnp
from jax import lax
from jax.experimental import pallas as pl
from jax.experimental.pallas import tpu as pltpu


# ----------------------------------------------------------------------------
# Fused Pallas kernel: (3x3 conv + folded BN + LeakyReLU) x 2, channel-major
# ----------------------------------------------------------------------------
def _double_conv_kernel(x_ref, cmask_ref, wa_ref, sa_ref, ba_ref,
                        wb_ref, sb_ref, bb_ref, o_ref, *, wp, w, th, h):
    """One row tile of ConvBlock_UNet, lane axis = flattened pixels.

    x_ref:     (1, 1, Cin, L)       bf16  zero-padded input slab (th+4 rows incl.
                                          2 halo rows each side, padded width wp,
                                          rows flattened, +8 zero tail)
    cmask_ref: (1, ma)              f32   1.0 at real image columns, 0.0 at the
                                          2 pad columns of every flattened row
    wa_ref:    (Cmid, 9*Cin)        bf16  conv_a weights, K index (dy*3+dx)*Cin+c
    sa_ref/ba_ref: (Cmid, 1)        f32   folded BN scale / shift (conv_a)
    wb_ref:    (Cout, 9*Cmid)       bf16  conv_b weights
    sb_ref/bb_ref: (Cout, 1)        f32   folded BN scale / shift (conv_b)
    o_ref:     (1, 1, Cout, th*wp)  f32   lane-dense output tile (pixels on lanes)
    """
    r = pl.program_id(1)
    cmid = wa_ref.shape[0]
    ma = (th + 2) * wp            # conv_a output: th + 2 rows (1-row halo for conv_b)
    mb = th * wp                  # conv_b output: th rows

    xs = x_ref[0, 0]                                            # (Cin, L) bf16

    # ---- conv_a: tap (dy, dx) of output flat index p lives at slab index
    # p + dy*wp + dx; the 9 lane-shifted slices are stacked along sublanes
    # (8-aligned -> cheap) into one deep-K operand.
    xcol = jnp.concatenate(
        [xs[:, dy * wp + dx: dy * wp + dx + ma]
         for dy in range(3) for dx in range(3)], axis=0)        # (9*Cin, ma)
    ya = jnp.dot(wa_ref[...], xcol, preferred_element_type=jnp.float32)  # (Cmid, ma)
    ya = ya * sa_ref[...] + ba_ref[...]                         # folded BatchNorm
    ya = jnp.maximum(ya, 0.01 * ya)                             # LeakyReLU(0.01)

    # Zero the positions that must act as conv_b's zero padding: the 2 pad
    # columns of every row (static mask operand) and out-of-image rows (first /
    # last tiles only; expressed as a flat-position range -> no vector int div).
    pos = lax.broadcasted_iota(jnp.int32, (1, ma), 1)
    lo = jnp.maximum(0, 1 - r * th) * wp                        # first valid flat pos
    hi = jnp.minimum(th + 2, h + 1 - r * th) * wp               # one past last valid
    ya = jnp.where((pos >= lo) & (pos < hi), ya, 0.0) * cmask_ref[...]
    ya = ya.astype(jnp.bfloat16)

    # ---- conv_b on conv_a's masked output (still in VMEM): one leading zero
    # makes the (dy=0, dx=0) tap of the first pixel in range, 7 trailing zeros
    # cover the (dy=2, dx=2) tap of the last pixel.
    yb_in = jnp.concatenate(
        [jnp.zeros((cmid, 1), jnp.bfloat16), ya,
         jnp.zeros((cmid, 7), jnp.bfloat16)], axis=-1)          # (Cmid, ma + 8)
    xcol = jnp.concatenate(
        [yb_in[:, dy * wp + dx: dy * wp + dx + mb]
         for dy in range(3) for dx in range(3)], axis=0)        # (9*Cmid, mb)
    yb = jnp.dot(wb_ref[...], xcol, preferred_element_type=jnp.float32)  # (Cout, mb)
    yb = yb * sb_ref[...] + bb_ref[...]
    yb = jnp.maximum(yb, 0.01 * yb)
    o_ref[0, 0] = yb.astype(o_ref.dtype)


# ----------------------------------------------------------------------------
# Tiling / VMEM budgeting (lane-padding aware, generation aware)
# ----------------------------------------------------------------------------
def _round_up(x, m):
    return ((x + m - 1) // m) * m


def _vmem_capacity_bytes():
    try:
        info = pltpu.get_tpu_info()
        cap = getattr(info, "vmem_capacity_bytes", None)
        if cap:
            return int(cap)
    except Exception:
        pass
    return 64 << 20   # conservative fallback (v7x-sized VMEM)


def _pick_tile_rows(h, w, cin, cmid, cout, n_batch, budget_bytes):
    """Largest row tile (multiple of 4) whose lane-padded VMEM footprint fits."""
    wp = w + 2

    def lanes(x):
        return _round_up(x, 128)

    def footprint(th):
        ma, mb, l = (th + 2) * wp, th * wp, (th + 4) * wp + 8
        slab = 2 * cin * lanes(l) * 2                      # bf16 slab, double-buffered
        out = 2 * cout * lanes(mb) * 4                     # f32 out tile, double-buffered
        xcol_a = 9 * cin * lanes(ma) * 2                   # merged im2col (conv_a)
        xcol_b = 9 * cmid * lanes(mb) * 2                  # merged im2col (conv_b)
        inter = cmid * lanes(ma) * (4 + 2) + cout * lanes(mb) * 4
        wts = 2 * (cmid * lanes(9 * cin) + cout * lanes(9 * cmid)) * 2 \
            + 2 * 4 * cmid * lanes(1) * 4 + 2 * lanes(ma) * 4
        return slab + out + xcol_a + xcol_b + inter + wts

    th = _round_up(max(h, 4), 4)
    while th > 4 and footprint(th) > budget_bytes:
        th -= 4
    # v7x megacore: keep >= 2 grid programs when the batch alone does not.
    if n_batch < 2 and th >= h and h > 4:
        th = max(4, _round_up((h + 1) // 2, 4))
    return th


# ----------------------------------------------------------------------------
# Fused ConvBlock_UNet wrapper
# ----------------------------------------------------------------------------
def double_conv3x3_bn_lrelu(x, wa, sa, ba, wb, sb, bb):
    """(conv3x3 + BN + LeakyReLU) x 2 on NCHW input, fused in one pallas_call.

    x: (N, Cin, H, W) f32.  wa: (Cmid, 9*Cin), wb: (Cout, 9*Cmid) merged-K
    weights; sa/ba/sb/bb: (C, 1) folded BN scale/shift.  Returns (N, Cout, H, W).
    """
    N, Cin, H, W = x.shape
    Cmid = wa.shape[0]
    Cout = wb.shape[0]
    Wp = W + 2

    cap = _vmem_capacity_bytes()
    vmem_limit = int(min(cap * 3 // 4, 96 << 20))
    TH = _pick_tile_rows(H, W, Cin, Cmid, Cout, N, budget_bytes=(vmem_limit * 3) // 4)
    R = -(-H // TH)
    ma = (TH + 2) * Wp
    mb = TH * Wp
    L = (TH + 4) * Wp + 8

    # Zero-pad (2 halo rows top, enough rows bottom to cover R*TH + 2, 1 col
    # each side), cast to bf16 and build the per-tile row slabs.  The pad /
    # channel-concat producer / cast / slab build fuse into one XLA pass; for
    # R == 1 this is just a reshape (no halo duplication).
    xp = jnp.pad(x.astype(jnp.bfloat16),
                 ((0, 0), (0, 0), (2, R * TH - H + 2), (1, 1)))
    if R == 1:
        slabs = xp.reshape(N, 1, Cin, (TH + 4) * Wp)
    else:
        # TODO(synk): for very large H*W, replace the overlapping slab stack by
        # a manual double-buffered DMA (memory_space=pl.ANY) to save one HBM pass.
        slabs = jnp.stack(
            [xp[:, :, r * TH: r * TH + TH + 4, :].reshape(N, Cin, (TH + 4) * Wp)
             for r in range(R)], axis=1)
    slabs = jnp.pad(slabs, ((0, 0), (0, 0), (0, 0), (0, 8)))    # tap-overrun tail

    # Static mask of real image columns inside each flattened (padded) row.
    cmask = (jnp.arange(ma, dtype=jnp.int32) % Wp < W).astype(jnp.float32)
    cmask = cmask.reshape(1, ma)

    out = pl.pallas_call(
        partial(_double_conv_kernel, wp=Wp, w=W, th=TH, h=H),
        out_shape=jax.ShapeDtypeStruct((N, R, Cout, mb), jnp.float32),
        grid=(N, R),
        in_specs=[
            pl.BlockSpec((1, 1, Cin, L), lambda n, r: (n, r, 0, 0)),
            pl.BlockSpec((1, ma), lambda n, r: (0, 0)),          # resident mask
            pl.BlockSpec((Cmid, 9 * Cin), lambda n, r: (0, 0)),  # resident weights
            pl.BlockSpec((Cmid, 1), lambda n, r: (0, 0)),
            pl.BlockSpec((Cmid, 1), lambda n, r: (0, 0)),
            pl.BlockSpec((Cout, 9 * Cmid), lambda n, r: (0, 0)),
            pl.BlockSpec((Cout, 1), lambda n, r: (0, 0)),
            pl.BlockSpec((Cout, 1), lambda n, r: (0, 0)),
        ],
        out_specs=pl.BlockSpec((1, 1, Cout, mb), lambda n, r: (n, r, 0, 0)),
        compiler_params=pltpu.CompilerParams(
            dimension_semantics=("parallel", "parallel"),
            vmem_limit_bytes=vmem_limit),
    )(slabs, cmask,
      wa.astype(jnp.bfloat16), sa.astype(jnp.float32), ba.astype(jnp.float32),
      wb.astype(jnp.bfloat16), sb.astype(jnp.float32), bb.astype(jnp.float32))

    # (N, R, Cout, TH*Wp) -> (N, Cout, R*TH, Wp) -> crop pad rows / halo columns.
    out = out.reshape(N, R, Cout, TH, Wp).transpose(0, 2, 1, 3, 4)
    return out.reshape(N, Cout, R * TH, Wp)[:, :, :H, :W]


# ----------------------------------------------------------------------------
# Non-kernel glue: 1x1 conv, 2x bilinear upsample (align_corners=True), concat
# ----------------------------------------------------------------------------
def _interp_matrix(n_out, n_in):
    """Interpolation matrix of nn.Upsample(scale=2, bilinear, align_corners=True)."""
    if n_in == 1:
        return jnp.ones((n_out, 1), jnp.float32)
    src = jnp.arange(n_out, dtype=jnp.float32) * (n_in - 1) / (n_out - 1)
    i0 = jnp.clip(jnp.floor(src).astype(jnp.int32), 0, n_in - 2)
    frac = src - i0.astype(jnp.float32)
    rows = jnp.arange(n_out)
    a = jnp.zeros((n_out, n_in), jnp.float32)
    a = a.at[rows, i0].add(1.0 - frac)
    a = a.at[rows, i0 + 1].add(frac)
    return a


def _fold_bn(bias, gamma, beta, mean, var, eps=1e-5):
    scale = gamma / jnp.sqrt(var + eps)
    shift = (bias - mean) * scale + beta
    return scale, shift


def _merge_conv3x3_weight(w_oihw):
    """torch Conv2d weight (Cout, Cin, 3, 3) -> (Cout, 9*Cin), K = (dy*3+dx)*Cin+c."""
    cout, cin = w_oihw.shape[0], w_oihw.shape[1]
    return jnp.transpose(w_oihw, (0, 2, 3, 1)).reshape(cout, 9 * cin)


# ----------------------------------------------------------------------------
# Forward pass (NCHW in / NCHW out, like the PyTorch module)
# ----------------------------------------------------------------------------
def up_block_unet_forward(x1, x2, p):
    # conv1x1 + 2x bilinear upsample: tiny contractions, left to XLA (per review).
    y = jnp.einsum('oc,nchw->nohw', p["w1x1"], x1) + p["b1x1"][None, :, None, None]
    N, C2, h, w = y.shape
    ah = _interp_matrix(2 * h, h)
    aw = _interp_matrix(2 * w, w)
    y = jnp.einsum('uh,nchw->ncuw', ah, y)
    y = jnp.einsum('vw,ncuw->ncuv', aw, y)
    x = jnp.concatenate([x2, y], axis=1)                  # torch.cat([x2, x1], dim=1)

    # ConvBlock_UNet, fused Pallas kernel.
    # TODO(synk): Dropout(p) is an identity in inference mode and is omitted.
    a, b = p["conv_a"], p["conv_b"]
    sa, ba = _fold_bn(a["bias"], a["gamma"], a["beta"], a["mean"], a["var"])
    sb, bb = _fold_bn(b["bias"], b["gamma"], b["beta"], b["mean"], b["var"])
    return double_conv3x3_bn_lrelu(
        x,
        _merge_conv3x3_weight(a["w"]), sa.reshape(-1, 1), ba.reshape(-1, 1),
        _merge_conv3x3_weight(b["w"]), sb.reshape(-1, 1), bb.reshape(-1, 1))


# ----------------------------------------------------------------------------
# Deterministic synthetic parameters (BN in inference mode)
# ----------------------------------------------------------------------------
def init_upblock_params(key, c1, c2, cout):
    def conv_bn(k, cin, co):
        kw, kb, kg, kbe, km, kv = jax.random.split(k, 6)
        return {
            "w": 0.1 * jax.random.normal(kw, (co, cin, 3, 3), jnp.float32),  # OIHW
            "bias": 0.1 * jax.random.normal(kb, (co,), jnp.float32),
            "gamma": 1.0 + 0.1 * jax.random.normal(kg, (co,), jnp.float32),
            "beta": 0.1 * jax.random.normal(kbe, (co,), jnp.float32),
            "mean": 0.1 * jax.random.normal(km, (co,), jnp.float32),
            "var": 1.0 + 0.1 * jnp.abs(jax.random.normal(kv, (co,), jnp.float32)),
        }
    k1, k2, k3, k4 = jax.random.split(key, 4)
    return {
        "w1x1": 0.1 * jax.random.normal(k1, (c2, c1), jnp.float32),  # (out, in)
        "b1x1": 0.1 * jax.random.normal(k2, (c2,), jnp.float32),
        "conv_a": conv_bn(k3, 2 * c2, cout),
        "conv_b": conv_bn(k4, cout, cout),
    }


# ----------------------------------------------------------------------------
if __name__ == "__main__":
    # UpBlock_UNet(in_channels1=32, in_channels2=16, out_channels=16, dropout_p=0.0)
    C1, C2, COUT = 32, 16, 16
    N, h = 2, 8                       # x1 is the low-res input; x2 is 2x larger

    key = jax.random.PRNGKey(0)
    kp, kx1, kx2 = jax.random.split(key, 3)
    params = init_upblock_params(kp, C1, C2, COUT)
    x1 = jax.random.normal(kx1, (N, C1, h, h), jnp.float32)
    x2 = jax.random.normal(kx2, (N, C2, 2 * h, 2 * h), jnp.float32)

    fwd = jax.jit(up_block_unet_forward)
    out = jax.block_until_ready(fwd(x1, x2, params))
    assert out.shape == (N, COUT, 2 * h, 2 * h), out.shape
    assert bool(jnp.all(jnp.isfinite(out)))
    print("KERNEL_OK")
</pallas_src>

<mosaic_0001>
module attributes {stable_mosaic.version = 11 : i64} {
  func.func @_double_conv_kernel(%arg0: i32, %arg1: i32, %arg2: memref<1x1x32x368xbf16, #tpu.memory_space<vmem>>, %arg3: memref<1x324xf32, #tpu.memory_space<vmem>>, %arg4: memref<16x288xbf16, #tpu.memory_space<vmem>>, %arg5: memref<16x1xf32, #tpu.memory_space<vmem>>, %arg6: memref<16x1xf32, #tpu.memory_space<vmem>>, %arg7: memref<16x144xbf16, #tpu.memory_space<vmem>>, %arg8: memref<16x1xf32, #tpu.memory_space<vmem>>, %arg9: memref<16x1xf32, #tpu.memory_space<vmem>>, %arg10: memref<1x1x16x288xf32, #tpu.memory_space<vmem>>) attributes {dimension_semantics = [#tpu.dimension_semantics<parallel>, #tpu.dimension_semantics<parallel>], iteration_bounds = array<i64: 2, 1>, scalar_prefetch = 0 : i64, scratch_operands = 0 : i64, tpu.core_type = #tpu.core_type<tc>, window_params = [{transform_indices = @transform_0, window_bounds = array<i64: 1, 1, 32, 368>}, {pipeline_mode = #tpu.pipeline_mode<synchronous>, transform_indices = @transform_1, window_bounds = array<i64: 1, 324>}, {pipeline_mode = #tpu.pipeline_mode<synchronous>, transform_indices = @transform_2, window_bounds = array<i64: 16, 288>}, {pipeline_mode = #tpu.pipeline_mode<synchronous>, transform_indices = @transform_3, window_bounds = array<i64: 16, 1>}, {pipeline_mode = #tpu.pipeline_mode<synchronous>, transform_indices = @transform_4, window_bounds = array<i64: 16, 1>}, {pipeline_mode = #tpu.pipeline_mode<synchronous>, transform_indices = @transform_5, window_bounds = array<i64: 16, 144>}, {pipeline_mode = #tpu.pipeline_mode<synchronous>, transform_indices = @transform_6, window_bounds = array<i64: 16, 1>}, {pipeline_mode = #tpu.pipeline_mode<synchronous>, transform_indices = @transform_7, window_bounds = array<i64: 16, 1>}, {transform_indices = @transform_8, window_bounds = array<i64: 1, 1, 16, 288>}]} {
    %c0 = arith.constant 0 : index
    %c0_0 = arith.constant 0 : index
    %c0_1 = arith.constant 0 : index
    %c0_2 = arith.constant 0 : index
    %0 = vector.load %arg2[%c0, %c0_0, %c0_1, %c0_2] : memref<1x1x32x368xbf16, #tpu.memory_space<vmem>>, vector<1x1x32x368xbf16>
    %1 = vector.shape_cast %0 : vector<1x1x32x368xbf16> to vector<32x368xbf16>
    %2 = vector.extract_strided_slice %1 {offsets = [0, 0], sizes = [32, 324], strides = [1, 1]} : vector<32x368xbf16> to vector<32x324xbf16>
    %3 = vector.extract_strided_slice %1 {offsets = [0, 1], sizes = [32, 324], strides = [1, 1]} : vector<32x368xbf16> to vector<32x324xbf16>
    %4 = vector.extract_strided_slice %1 {offsets = [0, 2], sizes = [32, 324], strides = [1, 1]} : vector<32x368xbf16> to vector<32x324xbf16>
    %5 = vector.extract_strided_slice %1 {offsets = [0, 18], sizes = [32, 324], strides = [1, 1]} : vector<32x368xbf16> to vector<32x324xbf16>
    %6 = vector.extract_strided_slice %1 {offsets = [0, 19], sizes = [32, 324], strides = [1, 1]} : vector<32x368xbf16> to vector<32x324xbf16>
    %7 = vector.extract_strided_slice %1 {offsets = [0, 20], sizes = [32, 324], strides = [1, 1]} : vector<32x368xbf16> to vector<32x324xbf16>
    %8 = vector.extract_strided_slice %1 {offsets = [0, 36], sizes = [32, 324], strides = [1, 1]} : vector<32x368xbf16> to vector<32x324xbf16>
    %9 = vector.extract_strided_slice %1 {offsets = [0, 37], sizes = [32, 324], strides = [1, 1]} : vector<32x368xbf16> to vector<32x324xbf16>
    %10 = vector.extract_strided_slice %1 {offsets = [0, 38], sizes = [32, 324], strides = [1, 1]} : vector<32x368xbf16> to vector<32x324xbf16>
    %11 = tpu.concatenate %2, %3, %4, %5, %6, %7, %8, %9, %10 in 0 : vector<32x324xbf16>, vector<32x324xbf16>, vector<32x324xbf16>, vector<32x324xbf16>, vector<32x324xbf16>, vector<32x324xbf16>, vector<32x324xbf16>, vector<32x324xbf16>, vector<32x324xbf16> -> vector<288x324xbf16>
    %c0_3 = arith.constant 0 : index
    %c0_4 = arith.constant 0 : index
    %12 = vector.load %arg4[%c0_3, %c0_4] : memref<16x288xbf16, #tpu.memory_space<vmem>>, vector<16x288xbf16>
    %cst = arith.constant dense<0.000000e+00> : vector<16x324xf32>
    %13 = tpu.matmul %12, %11, %cst {dimension_numbers = #tpu.dot_dimension_numbers<[1], [0], [0], [1], [0, 0, 1, 1], [], []>} : vector<16x288xbf16>, vector<288x324xbf16>, vector<16x324xf32> -> vector<16x324xf32>
    %c0_5 = arith.constant 0 : index
    %c0_6 = arith.constant 0 : index
    %14 = vector.load %arg5[%c0_5, %c0_6] : memref<16x1xf32, #tpu.memory_space<vmem>>, vector<16x1xf32>
    %15 = vector.broadcast %14 : vector<16x1xf32> to vector<16x324xf32>
    %16 = arith.mulf %13, %15 : vector<16x324xf32>
    %c0_7 = arith.constant 0 : index
    %c0_8 = arith.constant 0 : index
    %17 = vector.load %arg6[%c0_7, %c0_8] : memref<16x1xf32, #tpu.memory_space<vmem>>, vector<16x1xf32>
    %18 = vector.broadcast %17 : vector<16x1xf32> to vector<16x324xf32>
    %19 = arith.addf %16, %18 : vector<16x324xf32>
    %cst_9 = arith.constant 0.00999999977 : f32
    %20 = vector.broadcast %cst_9 : f32 to vector<16x324xf32>
    %21 = arith.mulf %20, %19 : vector<16x324xf32>
    %22 = arith.maximumf %19, %21 : vector<16x324xf32>
    %23 = tpu.iota {dimensions = array<i32: 1>} : vector<1x324xi32>
    %c16_i32 = arith.constant 16 : i32
    %24 = arith.muli %arg1, %c16_i32 : i32
    %c1_i32 = arith.constant 1 : i32
    %25 = arith.subi %c1_i32, %24 : i32
    %c0_i32 = arith.constant 0 : i32
    %26 = arith.maxsi %c0_i32, %25 : i32
    %c18_i32 = arith.constant 18 : i32
    %27 = arith.muli %26, %c18_i32 : i32
    %c16_i32_10 = arith.constant 16 : i32
    %28 = arith.muli %arg1, %c16_i32_10 : i32
    %c17_i32 = arith.constant 17 : i32
    %29 = arith.subi %c17_i32, %28 : i32
    %c18_i32_11 = arith.constant 18 : i32
    %30 = arith.minsi %c18_i32_11, %29 : i32
    %c18_i32_12 = arith.constant 18 : i32
    %31 = arith.muli %30, %c18_i32_12 : i32
    %32 = vector.broadcast %27 : i32 to vector<1x324xi32>
    %33 = arith.cmpi sge, %23, %32 : vector<1x324xi32>
    %34 = vector.broadcast %31 : i32 to vector<1x324xi32>
    %35 = arith.cmpi slt, %23, %34 : vector<1x324xi32>
    %36 = arith.andi %33, %35 : vector<1x324xi1>
    %cst_13 = arith.constant 0.000000e+00 : f32
    %37 = vector.shape_cast %36 : vector<1x324xi1> to vector<1x324xi1>
    %38 = vector.broadcast %37 : vector<1x324xi1> to vector<16x324xi1>
    %39 = vector.broadcast %cst_13 : f32 to vector<16x324xf32>
    %40 = arith.select %38, %22, %39 : vector<16x324xi1>, vector<16x324xf32>
    %c0_14 = arith.constant 0 : index
    %c0_15 = arith.constant 0 : index
    %41 = vector.load %arg3[%c0_14, %c0_15] : memref<1x324xf32, #tpu.memory_space<vmem>>, vector<1x324xf32>
    %42 = vector.broadcast %41 : vector<1x324xf32> to vector<16x324xf32>
    %43 = arith.mulf %40, %42 : vector<16x324xf32>
    %44 = arith.truncf %43 : vector<16x324xf32> to vector<16x324xbf16>
    %cst_16 = arith.constant 0.000000e+00 : bf16
    %45 = vector.broadcast %cst_16 : bf16 to vector<16x1xbf16>
    %cst_17 = arith.constant 0.000000e+00 : bf16
    %46 = vector.broadcast %cst_17 : bf16 to vector<16x7xbf16>
    %47 = tpu.concatenate %45, %44, %46 in 1 : vector<16x1xbf16>, vector<16x324xbf16>, vector<16x7xbf16> -> vector<16x332xbf16>
    %48 = vector.extract_strided_slice %47 {offsets = [0, 0], sizes = [16, 288], strides = [1, 1]} : vector<16x332xbf16> to vector<16x288xbf16>
    %49 = vector.extract_strided_slice %47 {offsets = [0, 1], sizes = [16, 288], strides = [1, 1]} : vector<16x332xbf16> to vector<16x288xbf16>
    %50 = vector.extract_strided_slice %47 {offsets = [0, 2], sizes = [16, 288], strides = [1, 1]} : vector<16x332xbf16> to vector<16x288xbf16>
    %51 = vector.extract_strided_slice %47 {offsets = [0, 18], sizes = [16, 288], strides = [1, 1]} : vector<16x332xbf16> to vector<16x288xbf16>
    %52 = vector.extract_strided_slice %47 {offsets = [0, 19], sizes = [16, 288], strides = [1, 1]} : vector<16x332xbf16> to vector<16x288xbf16>
    %53 = vector.extract_strided_slice %47 {offsets = [0, 20], sizes = [16, 288], strides = [1, 1]} : vector<16x332xbf16> to vector<16x288xbf16>
    %54 = vector.extract_strided_slice %47 {offsets = [0, 36], sizes = [16, 288], strides = [1, 1]} : vector<16x332xbf16> to vector<16x288xbf16>
    %55 = vector.extract_strided_slice %47 {offsets = [0, 37], sizes = [16, 288], strides = [1, 1]} : vector<16x332xbf16> to vector<16x288xbf16>
    %56 = vector.extract_strided_slice %47 {offsets = [0, 38], sizes = [16, 288], strides = [1, 1]} : vector<16x332xbf16> to vector<16x288xbf16>
    %57 = tpu.concatenate %48, %49, %50, %51, %52, %53, %54, %55, %56 in 0 : vector<16x288xbf16>, vector<16x288xbf16>, vector<16x288xbf16>, vector<16x288xbf16>, vector<16x288xbf16>, vector<16x288xbf16>, vector<16x288xbf16>, vector<16x288xbf16>, vector<16x288xbf16> -> vector<144x288xbf16>
    %c0_18 = arith.constant 0 : index
    %c0_19 = arith.constant 0 : index
    %58 = vector.load %arg7[%c0_18, %c0_19] : memref<16x144xbf16, #tpu.memory_space<vmem>>, vector<16x144xbf16>
    %cst_20 = arith.constant dense<0.000000e+00> : vector<16x288xf32>
    %59 = tpu.matmul %58, %57, %cst_20 {dimension_numbers = #tpu.dot_dimension_numbers<[1], [0], [0], [1], [0, 0, 1, 1], [], []>} : vector<16x144xbf16>, vector<144x288xbf16>, vector<16x288xf32> -> vector<16x288xf32>
    %c0_21 = arith.constant 0 : index
    %c0_22 = arith.constant 0 : index
    %60 = vector.load %arg8[%c0_21, %c0_22] : memref<16x1xf32, #tpu.memory_space<vmem>>, vector<16x1xf32>
    %61 = vector.broadcast %60 : vector<16x1xf32> to vector<16x288xf32>
    %62 = arith.mulf %59, %61 : vector<16x288xf32>
    %c0_23 = arith.constant 0 : index
    %c0_24 = arith.constant 0 : index
    %63 = vector.load %arg9[%c0_23, %c0_24] : memref<16x1xf32, #tpu.memory_space<vmem>>, vector<16x1xf32>
    %64 = vector.broadcast %63 : vector<16x1xf32> to vector<16x288xf32>
    %65 = arith.addf %62, %64 : vector<16x288xf32>
    %cst_25 = arith.constant 0.00999999977 : f32
    %66 = vector.broadcast %cst_25 : f32 to vector<16x288xf32>
    %67 = arith.mulf %66, %65 : vector<16x288xf32>
    %68 = arith.maximumf %65, %67 : vector<16x288xf32>
    %c0_26 = arith.constant 0 : index
    %c0_27 = arith.constant 0 : index
    %c0_28 = arith.constant 0 : index
    %c0_29 = arith.constant 0 : index
    %69 = vector.load %arg10[%c0_26, %c0_27, %c0_28, %c0_29] : memref<1x1x16x288xf32, #tpu.memory_space<vmem>>, vector<1x1x16x288xf32>
    %70 = vector.shape_cast %69 : vector<1x1x16x288xf32> to vector<16x288xf32>
    %71 = vector.shape_cast %68 : vector<16x288xf32> to vector<1x1x16x288xf32>
    tpu.vector_store %arg10[%c0_26, %c0_27, %c0_28, %c0_29], %71 {strides = array<i32>} : memref<1x1x16x288xf32, #tpu.memory_space<vmem>>, vector<1x1x16x288xf32>,
    return
  }
  func.func @transform_0(%arg0: i32, %arg1: i32) -> (i32, i32, i32, i32) {
    %c0_i32 = arith.constant 0 : i32
    %c0_i32_0 = arith.constant 0 : i32
    %c0_i32_1 = arith.constant 0 : i32
    return %arg0, %arg1, %c0_i32, %c0_i32_0 : i32, i32, i32, i32
  }
  func.func @transform_1(%arg0: i32, %arg1: i32) -> (i32, i32) {
    %c0_i32 = arith.constant 0 : i32
    %c0_i32_0 = arith.constant 0 : i32
    %c0_i32_1 = arith.constant 0 : i32
    return %c0_i32, %c0_i32_0 : i32, i32
  }
  func.func @transform_2(%arg0: i32, %arg1: i32) -> (i32, i32) {
    %c0_i32 = arith.constant 0 : i32
    %c0_i32_0 = arith.constant 0 : i32
    %c0_i32_1 = arith.constant 0 : i32
    return %c0_i32, %c0_i32_0 : i32, i32
  }
  func.func @transform_3(%arg0: i32, %arg1: i32) -> (i32, i32) {
    %c0_i32 = arith.constant 0 : i32
    %c0_i32_0 = arith.constant 0 : i32
    %c0_i32_1 = arith.constant 0 : i32
    return %c0_i32, %c0_i32_0 : i32, i32
  }
  func.func @transform_4(%arg0: i32, %arg1: i32) -> (i32, i32) {
    %c0_i32 = arith.constant 0 : i32
    %c0_i32_0 = arith.constant 0 : i32
    %c0_i32_1 = arith.constant 0 : i32
    return %c0_i32, %c0_i32_0 : i32, i32
  }
  func.func @transform_5(%arg0: i32, %arg1: i32) -> (i32, i32) {
    %c0_i32 = arith.constant 0 : i32
    %c0_i32_0 = arith.constant 0 : i32
    %c0_i32_1 = arith.constant 0 : i32
    return %c0_i32, %c0_i32_0 : i32, i32
  }
  func.func @transform_6(%arg0: i32, %arg1: i32) -> (i32, i32) {
    %c0_i32 = arith.constant 0 : i32
    %c0_i32_0 = arith.constant 0 : i32
    %c0_i32_1 = arith.constant 0 : i32
    return %c0_i32, %c0_i32_0 : i32, i32
  }
  func.func @transform_7(%arg0: i32, %arg1: i32) -> (i32, i32) {
    %c0_i32 = arith.constant 0 : i32
    %c0_i32_0 = arith.constant 0 : i32
    %c0_i32_1 = arith.constant 0 : i32
    return %c0_i32, %c0_i32_0 : i32, i32
  }
  func.func @transform_8(%arg0: i32, %arg1: i32) -> (i32, i32, i32, i32) {
    %c0_i32 = arith.constant 0 : i32
    %c0_i32_0 = arith.constant 0 : i32
    %c0_i32_1 = arith.constant 0 : i32
    return %arg0, %arg1, %c0_i32, %c0_i32_0 : i32, i32, i32, i32
  }
}

</mosaic_0001>

<llo_original>
// kernel: up_block_unet_forward.1
$region0: #{up_block_unet_forward.1}
  #allocation0 [shape = 'u32[]', space=smem, size = 0x4, offset = 0x4, fixed_abs, tag = 'smem constant byte address 0x4 - core index']
  #allocation1 [shape = 'u32[72,128]{1,0:T(1,128)}', space=vmem, size = 0x9000, scoped, tag = 'internal scratch']
  %s0 = inlined_call_operand.vmem [shape: bf16[2,1,32,368], index: 0, kind: input, shape index: {}]
  %s1 = inlined_call_operand.vmem [shape: f32[1,324], index: 1, kind: input, shape index: {}]
  %s2 = inlined_call_operand.vmem [shape: bf16[16,288], index: 2, kind: input, shape index: {}]
  %s3 = inlined_call_operand.vmem [shape: f32[16,1], index: 3, kind: input, shape index: {}]
  %s4 = inlined_call_operand.vmem [shape: f32[16,1], index: 4, kind: input, shape index: {}]
  %s5 = inlined_call_operand.vmem [shape: bf16[16,144], index: 5, kind: input, shape index: {}]
  %s6 = inlined_call_operand.vmem [shape: f32[16,1], index: 6, kind: input, shape index: {}]
  %s7 = inlined_call_operand.vmem [shape: f32[16,1], index: 7, kind: input, shape index: {}]
  %s8 = inlined_call_operand.vmem [shape: f32[2,1,16,288], index: 8, kind: output, shape index: {}]
  %s9 = sld [smem:[#allocation0]]
  $region65: #{up_block_unet_forward.1} parent=0
    _
  %s11 = ssub.s32 1, %s9
  %s12 = scalar_select 0, %s11, %s9
  loop: start=0, step=1, limit=4
  $region2: #{up_block_unet_forward.1} parent=0 // loop_pre_header
    _
  $region3: #{up_block_unet_forward.1} parent=0 // loop_header
    %s14 = sphi 0, %s18
    %p15 = scmp.ge.s32.totalorder %s14, 4
    %s21 = sphi 0, %s33
    %s22 = sphi 0, %s29
    %s23 = sphi 0, %s21
    %s24 = sphi 0, %s22
    %s25 = sphi 0, %s23
    %s26 = sphi 0, %s24
    %s38 = sphi 0, %s40
    %s41 = sphi 0, %s38
    %s42 = sphi 0, %s41
    %s58 = sphi 0, %s42
    %s62 = sphi 0, %s62
    %s64 = sphi 0, %s62
    %s65 = sphi 0, %s64
    %s79 = sphi 0, %s65
    %s83 = sphi 0, %s83
    %s85 = sphi 0, %s83
    %s86 = sphi 0, %s85
    %s100 = sphi 0, %s86
    %s104 = sphi 0, %s104
    %s106 = sphi 0, %s104
    %s107 = sphi 0, %s106
    %s121 = sphi 0, %s107
    %s125 = sphi 0, %s125
    %s127 = sphi 0, %s125
    %s128 = sphi 0, %s127
    %s142 = sphi 0, %s128
    %s146 = sphi 0, %s146
    %s148 = sphi 0, %s146
    %s149 = sphi 0, %s148
    %s163 = sphi 0, %s149
    %s167 = sphi 0, %s167
    %s169 = sphi 0, %s167
    %s170 = sphi 0, %s169
    %s184 = sphi 0, %s170
    %s188 = sphi 0, %s188
    %s190 = sphi 0, %s188
    %s191 = sphi 0, %s190
    %s205 = sphi 0, %s191
    %s213 = sphi 0, %s215
    %s216 = sphi 0, %s213
    %s217 = sphi 0, %s216
    %s233 = sphi 0, %s217
  $region4: #{up_block_unet_forward.1} parent=0 // loop_header_branch
    %17 = sbr.rel (%p15) target = $region8
  $region5: #{up_block_unet_forward.1} parent=0 // loop_body
    %s19 = ssub.s32 %s14, 1
    %s20 = ssub.s32 %s14, 2
    %s27 = sadd.s32 1, %s22
    %p28 = scmp.ge.s32.totalorder %s27, 1
    %s29 = scalar_select %p28, 0, %s27
    %s30 = sadd.s32 1, %s21
    %s31 = scalar_select %p28, %s30, %s21
    %p32 = scmp.ge.s32.totalorder %s31, 2
    %s33 = scalar_select %p32, 0, %s31
    %s34 = ssub.s32 %s21, %s33
    %s35 = ssub.s32 %s22, %s29
    %s36 = sor.u32 %s34, %s35
    %p37 = scmp.eq.s32.totalorder %s36, 0
    %s39 = sadd.s32 %s38, 1
    %s40 = scalar_select %p37, %s38, %s39
    %p43 = pneg %p37
    %p44 = scmp.eq.s32.totalorder %s14, 1
    %p45 = por %p43, %p44
    %p46 = scmp.ne.s32.totalorder %s38, %s41
    %p47 = scmp.eq.s32.totalorder %s14, 0
    %p48 = por %p46, %p47
    %p49 = scmp.ne.s32.totalorder %s38, %s41
    %p50 = scmp.eq.s32.totalorder %s19, 1
    %p51 = por %p49, %p50
    %p52 = scmp.ne.s32.totalorder %s41, %s42
    %p53 = scmp.eq.s32.totalorder %s19, 0
    %p54 = por %p52, %p53
    %p55 = scmp.ne.s32.totalorder %s41, %s42
    %p56 = scmp.eq.s32.totalorder %s20, 1
    %p57 = por %p55, %p56
    %p59 = scmp.ne.s32.totalorder %s42, %s58
    %p60 = scmp.eq.s32.totalorder %s20, 0
    %p61 = por %p59, %p60
    %s63 = sadd.s32 %s62, 1
    %p66 = scmp.eq.s32.totalorder %s14, 1
    %p67 = scmp.ne.s32.totalorder %s62, %s64
    %p68 = scmp.eq.s32.totalorder %s14, 0
    %p69 = por %p67, %p68
    %p70 = scmp.ne.s32.totalorder %s62, %s64
    %p71 = scmp.eq.s32.totalorder %s19, 1
    %p72 = por %p70, %p71
    %p73 = scmp.ne.s32.totalorder %s64, %s65
    %p74 = scmp.eq.s32.totalorder %s19, 0
    %p75 = por %p73, %p74
    %p76 = scmp.ne.s32.totalorder %s64, %s65
    %p77 = scmp.eq.s32.totalorder %s20, 1
    %p78 = por %p76, %p77
    %p80 = scmp.ne.s32.totalorder %s65, %s79
    %p81 = scmp.eq.s32.totalorder %s20, 0
    %p82 = por %p80, %p81
    %s84 = sadd.s32 %s83, 1
    %p87 = scmp.eq.s32.totalorder %s14, 1
    %p88 = scmp.ne.s32.totalorder %s83, %s85
    %p89 = scmp.eq.s32.totalorder %s14, 0
    %p90 = por %p88, %p89
    %p91 = scmp.ne.s32.totalorder %s83, %s85
    %p92 = scmp.eq.s32.totalorder %s19, 1
    %p93 = por %p91, %p92
    %p94 = scmp.ne.s32.totalorder %s85, %s86
    %p95 = scmp.eq.s32.totalorder %s19, 0
    %p96 = por %p94, %p95
    %p97 = scmp.ne.s32.totalorder %s85, %s86
    %p98 = scmp.eq.s32.totalorder %s20, 1
    %p99 = por %p97, %p98
    %p101 = scmp.ne.s32.totalorder %s86, %s100
    %p102 = scmp.eq.s32.totalorder %s20, 0
    %p103 = por %p101, %p102
    %s105 = sadd.s32 %s104, 1
    %p108 = scmp.eq.s32.totalorder %s14, 1
    %p109 = scmp.ne.s32.totalorder %s104, %s106
    %p110 = scmp.eq.s32.totalorder %s14, 0
    %p111 = por %p109, %p110
    %p112 = scmp.ne.s32.totalorder %s104, %s106
    %p113 = scmp.eq.s32.totalorder %s19, 1
    %p114 = por %p112, %p113
    %p115 = scmp.ne.s32.totalorder %s106, %s107
    %p116 = scmp.eq.s32.totalorder %s19, 0
    %p117 = por %p115, %p116
    %p118 = scmp.ne.s32.totalorder %s106, %s107
    %p119 = scmp.eq.s32.totalorder %s20, 1
    %p120 = por %p118, %p119
    %p122 = scmp.ne.s32.totalorder %s107, %s121
    %p123 = scmp.eq.s32.totalorder %s20, 0
    %p124 = por %p122, %p123
    %s126 = sadd.s32 %s125, 1
    %p129 = scmp.eq.s32.totalorder %s14, 1
    %p130 = scmp.ne.s32.totalorder %s125, %s127
    %p131 = scmp.eq.s32.totalorder %s14, 0
    %p132 = por %p130, %p131
    %p133 = scmp.ne.s32.totalorder %s125, %s127
    %p134 = scmp.eq.s32.totalorder %s19, 1
    %p135 = por %p133, %p134
    %p136 = scmp.ne.s32.totalorder %s127, %s128
    %p137 = scmp.eq.s32.totalorder %s19, 0
    %p138 = por %p136, %p137
    %p139 = scmp.ne.s32.totalorder %s127, %s128
    %p140 = scmp.eq.s32.totalorder %s20, 1
    %p141 = por %p139, %p140
    %p143 = scmp.ne.s32.totalorder %s128, %s142
    %p144 = scmp.eq.s32.totalorder %s20, 0
    %p145 = por %p143, %p144
    %s147 = sadd.s32 %s146, 1
    %p150 = scmp.eq.s32.totalorder %s14, 1
    %p151 = scmp.ne.s32.totalorder %s146, %s148
    %p152 = scmp.eq.s32.totalorder %s14, 0
    %p153 = por %p151, %p152
    %p154 = scmp.ne.s32.totalorder %s146, %s148
    %p155 = scmp.eq.s32.totalorder %s19, 1
    %p156 = por %p154, %p155
    %p157 = scmp.ne.s32.totalorder %s148, %s149
    %p158 = scmp.eq.s32.totalorder %s19, 0
    %p159 = por %p157, %p158
    %p160 = scmp.ne.s32.totalorder %s148, %s149
    %p161 = scmp.eq.s32.totalorder %s20, 1
    %p162 = por %p160, %p161
    %p164 = scmp.ne.s32.totalorder %s149, %s163
    %p165 = scmp.eq.s32.totalorder %s20, 0
    %p166 = por %p164, %p165
    %s168 = sadd.s32 %s167, 1
    %p171 = scmp.eq.s32.totalorder %s14, 1
    %p172 = scmp.ne.s32.totalorder %s167, %s169
    %p173 = scmp.eq.s32.totalorder %s14, 0
    %p174 = por %p172, %p173
    %p175 = scmp.ne.s32.totalorder %s167, %s169
    %p176 = scmp.eq.s32.totalorder %s19, 1
    %p177 = por %p175, %p176
    %p178 = scmp.ne.s32.totalorder %s169, %s170
    %p179 = scmp.eq.s32.totalorder %s19, 0
    %p180 = por %p178, %p179
    %p181 = scmp.ne.s32.totalorder %s169, %s170
    %p182 = scmp.eq.s32.totalorder %s20, 1
    %p183 = por %p181, %p182
    %p185 = scmp.ne.s32.totalorder %s170, %s184
    %p186 = scmp.eq.s32.totalorder %s20, 0
    %p187 = por %p185, %p186
    %s189 = sadd.s32 %s188, 1
    %p192 = scmp.eq.s32.totalorder %s14, 1
    %p193 = scmp.ne.s32.totalorder %s188, %s190
    %p194 = scmp.eq.s32.totalorder %s14, 0
    %p195 = por %p193, %p194
    %p196 = scmp.ne.s32.totalorder %s188, %s190
    %p197 = scmp.eq.s32.totalorder %s19, 1
    %p198 = por %p196, %p197
    %p199 = scmp.ne.s32.totalorder %s190, %s191
    %p200 = scmp.eq.s32.totalorder %s19, 0
    %p201 = por %p199, %p200
    %p202 = scmp.ne.s32.totalorder %s190, %s191
    %p203 = scmp.eq.s32.totalorder %s20, 1
    %p204 = por %p202, %p203
    %p206 = scmp.ne.s32.totalorder %s191, %s205
    %p207 = scmp.eq.s32.totalorder %s20, 0
    %p208 = por %p206, %p207
    %s209 = ssub.s32 %s21, %s33
    %s210 = ssub.s32 %s22, %s29
    %s211 = sor.u32 %s209, %s210
    %p212 = scmp.eq.s32.totalorder %s211, 0
    %s214 = sadd.s32 %s213, 1
    %s215 = scalar_select %p212, %s213, %s214
    %p218 = pneg %p212
    %p219 = scmp.eq.s32.totalorder %s14, 1
    %p220 = por %p218, %p219
    %p221 = scmp.ne.s32.totalorder %s213, %s216
    %p222 = scmp.eq.s32.totalorder %s14, 0
    %p223 = por %p221, %p222
    %p224 = scmp.ne.s32.totalorder %s213, %s216
    %p225 = scmp.eq.s32.totalorder %s19, 1
    %p226 = por %p224, %p225
    %p227 = scmp.ne.s32.totalorder %s216, %s217
    %p228 = scmp.eq.s32.totalorder %s19, 0
    %p229 = por %p227, %p228
    %p230 = scmp.ne.s32.totalorder %s216, %s217
    %p231 = scmp.eq.s32.totalorder %s20, 1
    %p232 = por %p230, %p231
    %p234 = scmp.ne.s32.totalorder %s217, %s233
    %p235 = scmp.eq.s32.totalorder %s20, 0
    %p236 = por %p234, %p235
    %p237 = scmp.le.s32.totalorder 1, %s14
    %p238 = scmp.lt.s32.totalorder %s14, 3
    %p239 = pnand %p237, %p238
    %p240 = pneg %p239
    // Predicated region
    $region9: #{up_block_unet_forward.1} parent=5 // pred_check
      _
    $region10: #{up_block_unet_forward.1} parent=5 // pred_check_branch
      %242 = sbr.rel (%p239) target = $region12
    $region11: #{up_block_unet_forward.1} parent=5 // pred_region
      %s243 = ssub.s32 %s14, 1
      // Predicated region
      $region13: #{up_block_unet_forward.1} parent=11 // pred_check
        %p244 = pneg %p75
      $region14: #{up_block_unet_forward.1} parent=11 // pred_check_branch
        %246 = sbr.rel (%p244) target = $region16
      $region15: #{up_block_unet_forward.1} parent=11 // pred_region
        _
      $region16: #{up_block_unet_forward.1} parent=11 // pred_fallthru
        _
      // Predicated region
      $region17: #{up_block_unet_forward.1} parent=11 // pred_check
        %p247 = pneg %p96
      $region18: #{up_block_unet_forward.1} parent=11 // pred_check_branch
        %249 = sbr.rel (%p247) target = $region20
      $region19: #{up_block_unet_forward.1} parent=11 // pred_region
        _
      $region20: #{up_block_unet_forward.1} parent=11 // pred_fallthru
        _
      // Predicated region
      $region21: #{up_block_unet_forward.1} parent=11 // pred_check
        %p250 = pneg %p117
      $region22: #{up_block_unet_forward.1} parent=11 // pred_check_branch
        %252 = sbr.rel (%p250) target = $region24
      $region23: #{up_block_unet_forward.1} parent=11 // pred_region
        _
      $region24: #{up_block_unet_forward.1} parent=11 // pred_fallthru
        _
      // Predicated region
      $region25: #{up_block_unet_forward.1} parent=11 // pred_check
        %p253 = pneg %p138
      $region26: #{up_block_unet_forward.1} parent=11 // pred_check_branch
        %255 = sbr.rel (%p253) target = $region28
      $region27: #{up_block_unet_forward.1} parent=11 // pred_region
        _
      $region28: #{up_block_unet_forward.1} parent=11 // pred_fallthru
        _
      // Predicated region
      $region29: #{up_block_unet_forward.1} parent=11 // pred_check
        %p256 = pneg %p159
      $region30: #{up_block_unet_forward.1} parent=11 // pred_check_branch
        %258 = sbr.rel (%p256) target = $region32
      $region31: #{up_block_unet_forward.1} parent=11 // pred_region
        _
      $region32: #{up_block_unet_forward.1} parent=11 // pred_fallthru
        _
      // Predicated region
      $region33: #{up_block_unet_forward.1} parent=11 // pred_check
        %p259 = pneg %p180
      $region34: #{up_block_unet_forward.1} parent=11 // pred_check_branch
        %261 = sbr.rel (%p259) target = $region36
      $region35: #{up_block_unet_forward.1} parent=11 // pred_region
        _
      $region36: #{up_block_unet_forward.1} parent=11 // pred_fallthru
        _
      // Predicated region
      $region37: #{up_block_unet_forward.1} parent=11 // pred_check
        %p262 = pneg %p201
      $region38: #{up_block_unet_forward.1} parent=11 // pred_check_branch
        %264 = sbr.rel (%p262) target = $region40
      $region39: #{up_block_unet_forward.1} parent=11 // pred_region
        _
      $region40: #{up_block_unet_forward.1} parent=11 // pred_fallthru
        _
    $region12: #{up_block_unet_forward.1} parent=5 // pred_fallthru
      _
    %p265 = scmp.lt.s32.totalorder %s14, 2
    // Predicated region
    $region41: #{up_block_unet_forward.1} parent=5 // pred_check
      %p266 = pneg %p265
    $region42: #{up_block_unet_forward.1} parent=5 // pred_check_branch
      %268 = sbr.rel (%p266) target = $region44
    $region43: #{up_block_unet_forward.1} parent=5 // pred_region
      // Predicated region
      $region45: #{up_block_unet_forward.1} parent=43 // pred_check
        %p269 = pneg %p48
      $region46: #{up_block_unet_forward.1} parent=43 // pred_check_branch
        %271 = sbr.rel (%p269) target = $region48
      $region47: #{up_block_unet_forward.1} parent=43 // pred_region
        %p272 = scmp.lt.s32.totalorder %s21, 1
        %s273 = scalar_select %p272, %s21, 1
        %p274 = scmp.lt.s32.totalorder %s22, 0
        %s275 = scalar_select %p274, %s22, 0
        %s276 = smul.addr %s275, 12
        %s277 = smul.addr %s273, 12
        %s278 = sadd.s32 %s276, %s277
        %s279 = smul.addr %s278, 4
        %s280 = scalar_lea.vmem %s0, %s279
      $region48: #{up_block_unet_forward.1} parent=43 // pred_fallthru
        _
    $region44: #{up_block_unet_forward.1} parent=5 // pred_fallthru
      _
    %p281 = scmp.le.s32.totalorder 1, %s14
    %p282 = scmp.lt.s32.totalorder %s14, 3
    %p283 = pnand %p281, %p282
    %p284 = pneg %p283
    // Predicated region
    $region49: #{up_block_unet_forward.1} parent=5 // pred_check
      _
    $region50: #{up_block_unet_forward.1} parent=5 // pred_check_branch
      %286 = sbr.rel (%p283) target = $region52
    $region51: #{up_block_unet_forward.1} parent=5 // pred_region
      %s287 = ssub.s32 %s14, 1
      %p288 = scmp.lt.s32.totalorder %s23, 1
      %s289 = scalar_select %p288, %s23, 1
      %p290 = scmp.lt.s32.totalorder %s24, 0
      %s291 = scalar_select %p290, %s24, 0
      %s292 = smul.addr %s291, 12
      %s293 = smul.addr %s289, 12
      %s294 = sadd.s32 %s292, %s293
      %s295 = smul.addr %s294, 4
      %s296 = scalar_lea.vmem %s0, %s295
      %p297 = pneg %p54
      %p298 = pneg %p51
      %p299 = pneg %p75
      %p300 = pneg %p72
      %p301 = pneg %p96
      %p302 = pneg %p93
      %p303 = pneg %p117
      %p304 = pneg %p114
      %p305 = pneg %p138
      %p306 = pneg %p135
      %p307 = pneg %p159
      %p308 = pneg %p156
      %p309 = pneg %p180
      %p310 = pneg %p177
      %p311 = pneg %p201
      %p312 = pneg %p198
      %p313 = pneg %p229
      %p314 = pneg %p226
      %p315 = scmp.lt.s32.totalorder %s23, 1
      %s316 = scalar_select %p315, %s23, 1
      %p317 = scmp.lt.s32.totalorder %s24, 0
      %s318 = scalar_select %p317, %s24, 0
      %s319 = smul.addr %s318, 6
      %s320 = smul.addr %s316, 6
      %s321 = sadd.s32 %s319, %s320
      %s322 = smul.addr %s321, 8
      %s323 = scalar_lea.vmem %s8, %s322
      %p324 = scmp.lt.s32.totalorder %s23, 1
      %s325 = scalar_select %p324, %s23, 1
      %p326 = scmp.lt.s32.totalorder %s24, 0
      %s327 = scalar_select %p326, %s24, 0
      %s328 = smul.addr %s327, 12
      %s329 = smul.addr %s325, 12
      %s330 = sadd.s32 %s328, %s329
      %s331 = smul.addr %s330, 4
      %s332 = scalar_lea.vmem %s0, %s331
      %p333 = scmp.lt.s32.totalorder %s23, 1
      %s334 = scalar_select %p333, %s23, 1
      %p335 = scmp.lt.s32.totalorder %s24, 0
      %s336 = scalar_select %p335, %s24, 0
      %s337 = smul.addr %s336, 6
      %s338 = smul.addr %s334, 6
      %s339 = sadd.s32 %s337, %s338
      %s340 = smul.addr %s339, 8
      %s341 = scalar_lea.vmem %s8, %s340
      %v343 = vld [vmem:[%s332] sm:$0xff]
      %v344 = vld [vmem:[%s332 + $0x8] sm:$0xf]
      %v345 = vld [vmem:[%s332 + $0xc] sm:$0xff]
      %v346 = vld [vmem:[%s332 + $0x14] sm:$0xf]
      %v347 = vld [vmem:[%s332 + $0x18] sm:$0xff]
      %v348 = vld [vmem:[%s332 + $0x20] sm:$0xf]
      %v349 = vld [vmem:[%s332 + $0x24] sm:$0xff]
      %v350 = vld [vmem:[%s332 + $0x2c] sm:$0xf]
      %v359 = vunpack.c.l.b16 %v343
      %v360 = vunpack.c.h.b16 %v343
      %v361 = vunpack.c.l.b16 %v344
      %v362 = vunpack.c.l.b16 %v345
      %v363 = vunpack.c.h.b16 %v345
      %v364 = vunpack.c.l.b16 %v346
      %v365 = vunpack.c.l.b16 %v347
      %v366 = vunpack.c.h.b16 %v347
      %v367 = vunpack.c.l.b16 %v348
      %v368 = vunpack.c.l.b16 %v349
      %v369 = vunpack.c.h.b16 %v349
      %v370 = vunpack.c.l.b16 %v350
      %v371 = vpack.c.b16 %v362, %v359
      %v372 = vpack.c.b16 %v363, %v360
      %v373 = vpack.c.b16 %v364, %v361
      %v374 = vpack.c.b16 %v368, %v365
      %v375 = vpack.c.b16 %v369, %v366
      %v376 = vpack.c.b16 %v370, %v367
      %383 = vrot.lane.b32.xlu0 %v371, 127
      %v384 = vpop.permute.xlu0 %383
      %385 = vrot.lane.b32.xlu0 %v372, 127
      %v386 = vpop.permute.xlu0 %385
      %387 = vrot.lane.b32.xlu0 %v373, 127
      %v388 = vpop.permute.xlu0 %387
      %389 = vrot.lane.b32.xlu0 %v374, 127
      %v390 = vpop.permute.xlu0 %389
      %391 = vrot.lane.b32.xlu0 %v375, 127
      %v392 = vpop.permute.xlu0 %391
      %393 = vrot.lane.b32.xlu0 %v376, 127
      %v394 = vpop.permute.xlu0 %393
      %vm395 = vcmask 1039360
      %v396 = vsel %vm395, %v384, %v386
      %v397 = vsel %vm395, %v386, %v388
      %v398 = vsel %vm395, %v390, %v392
      %v399 = vsel %vm395, %v392, %v394
      %406 = vrot.lane.b32.xlu0 %v371, 126
      %v407 = vpop.permute.xlu0 %406
      %408 = vrot.lane.b32.xlu0 %v372, 126
      %v409 = vpop.permute.xlu0 %408
      %410 = vrot.lane.b32.xlu0 %v373, 126
      %v411 = vpop.permute.xlu0 %410
      %412 = vrot.lane.b32.xlu0 %v374, 126
      %v413 = vpop.permute.xlu0 %412
      %414 = vrot.lane.b32.xlu0 %v375, 126
      %v415 = vpop.permute.xlu0 %414
      %416 = vrot.lane.b32.xlu0 %v376, 126
      %v417 = vpop.permute.xlu0 %416
      %vm418 = vcmask 1031168
      %v419 = vsel %vm418, %v407, %v409
      %v420 = vsel %vm418, %v409, %v411
      %v421 = vsel %vm418, %v413, %v415
      %v422 = vsel %vm418, %v415, %v417
      %429 = vrot.lane.b32.xlu0 %v371, 110
      %v430 = vpop.permute.xlu0 %429
      %431 = vrot.lane.b32.xlu0 %v372, 110
      %v432 = vpop.permute.xlu0 %431
      %433 = vrot.lane.b32.xlu0 %v373, 110
      %v434 = vpop.permute.xlu0 %433
      %435 = vrot.lane.b32.xlu0 %v374, 110
      %v436 = vpop.permute.xlu0 %435
      %437 = vrot.lane.b32.xlu0 %v375, 110
      %v438 = vpop.permute.xlu0 %437
      %439 = vrot.lane.b32.xlu0 %v376, 110
      %v440 = vpop.permute.xlu0 %439
      %vm441 = vcmask 900096
      %v442 = vsel %vm441, %v430, %v432
      %v443 = vsel %vm441, %v432, %v434
      %v444 = vsel %vm441, %v436, %v438
      %v445 = vsel %vm441, %v438, %v440
      %452 = vrot.lane.b32.xlu0 %v371, 109
      %v453 = vpop.permute.xlu0 %452
      %454 = vrot.lane.b32.xlu0 %v372, 109
      %v455 = vpop.permute.xlu0 %454
      %456 = vrot.lane.b32.xlu0 %v373, 109
      %v457 = vpop.permute.xlu0 %456
      %458 = vrot.lane.b32.xlu0 %v374, 109
      %v459 = vpop.permute.xlu0 %458
      %460 = vrot.lane.b32.xlu0 %v375, 109
      %v461 = vpop.permute.xlu0 %460
      %462 = vrot.lane.b32.xlu0 %v376, 109
      %v463 = vpop.permute.xlu0 %462
      %vm464 = vcmask 891904
      %v465 = vsel %vm464, %v453, %v455
      %v466 = vsel %vm464, %v455, %v457
      %v467 = vsel %vm464, %v459, %v461
      %v468 = vsel %vm464, %v461, %v463
      %475 = vrot.lane.b32.xlu0 %v371, 108
      %v476 = vpop.permute.xlu0 %475
      %477 = vrot.lane.b32.xlu0 %v372, 108
      %v478 = vpop.permute.xlu0 %477
      %479 = vrot.lane.b32.xlu0 %v373, 108
      %v480 = vpop.permute.xlu0 %479
      %481 = vrot.lane.b32.xlu0 %v374, 108
      %v482 = vpop.permute.xlu0 %481
      %483 = vrot.lane.b32.xlu0 %v375, 108
      %v484 = vpop.permute.xlu0 %483
      %485 = vrot.lane.b32.xlu0 %v376, 108
      %v486 = vpop.permute.xlu0 %485
      %vm487 = vcmask 883712
      %v488 = vsel %vm487, %v476, %v478
      %v489 = vsel %vm487, %v478, %v480
      %v490 = vsel %vm487, %v482, %v484
      %v491 = vsel %vm487, %v484, %v486
      %498 = vrot.lane.b32.xlu0 %v371, 92
      %v499 = vpop.permute.xlu0 %498
      %500 = vrot.lane.b32.xlu0 %v372, 92
      %v501 = vpop.permute.xlu0 %500
      %502 = vrot.lane.b32.xlu0 %v373, 92
      %v503 = vpop.permute.xlu0 %502
      %504 = vrot.lane.b32.xlu0 %v374, 92
      %v505 = vpop.permute.xlu0 %504
      %506 = vrot.lane.b32.xlu0 %v375, 92
      %v507 = vpop.permute.xlu0 %506
      %508 = vrot.lane.b32.xlu0 %v376, 92
      %v509 = vpop.permute.xlu0 %508
      %vm510 = vcmask 752640
      %v511 = vsel %vm510, %v499, %v501
      %v512 = vsel %vm510, %v501, %v503
      %v513 = vsel %vm510, %v505, %v507
      %v514 = vsel %vm510, %v507, %v509
      %521 = vrot.lane.b32.xlu0 %v371, 91
      %v522 = vpop.permute.xlu0 %521
      %523 = vrot.lane.b32.xlu0 %v372, 91
      %v524 = vpop.permute.xlu0 %523
      %525 = vrot.lane.b32.xlu0 %v373, 91
      %v526 = vpop.permute.xlu0 %525
      %527 = vrot.lane.b32.xlu0 %v374, 91
      %v528 = vpop.permute.xlu0 %527
      %529 = vrot.lane.b32.xlu0 %v375, 91
      %v530 = vpop.permute.xlu0 %529
      %531 = vrot.lane.b32.xlu0 %v376, 91
      %v532 = vpop.permute.xlu0 %531
      %vm533 = vcmask 744448
      %v534 = vsel %vm533, %v522, %v524
      %v535 = vsel %vm533, %v524, %v526
      %v536 = vsel %vm533, %v528, %v530
      %v537 = vsel %vm533, %v530, %v532
      %544 = vrot.lane.b32.xlu0 %v371, 90
      %v545 = vpop.permute.xlu0 %544
      %546 = vrot.lane.b32.xlu0 %v372, 90
      %v547 = vpop.permute.xlu0 %546
      %548 = vrot.lane.b32.xlu0 %v373, 90
      %v549 = vpop.permute.xlu0 %548
      %550 = vrot.lane.b32.xlu0 %v374, 90
      %v551 = vpop.permute.xlu0 %550
      %552 = vrot.lane.b32.xlu0 %v375, 90
      %v553 = vpop.permute.xlu0 %552
      %554 = vrot.lane.b32.xlu0 %v376, 90
      %v555 = vpop.permute.xlu0 %554
      %vm556 = vcmask 736256
      %v557 = vsel %vm556, %v545, %v547
      %v558 = vsel %vm556, %v547, %v549
      %v559 = vsel %vm556, %v551, %v553
      %v560 = vsel %vm556, %v553, %v555
      %v567 = vld [vmem:[%s2] sm:$0xff]
      %v568 = vld [vmem:[%s2 + $0x8] sm:$0xf]
      %v569 = vld [vmem:[%s2 + $0xc] sm:$0xff]
      %v570 = vld [vmem:[%s2 + $0x14] sm:$0xf]
      %v575 = vunpack.c.l.b16 %v567
      %v576 = vunpack.c.h.b16 %v567
      %v577 = vunpack.c.l.b16 %v568
      %v578 = vunpack.c.l.b16 %v569
      %v579 = vunpack.c.h.b16 %v569
      %v580 = vunpack.c.l.b16 %v570
      %v581 = vpack.c.b16 %v578, %v575
      %v582 = vpack.c.b16 %v579, %v576
      %v583 = vpack.c.b16 %v580, %v577
      %vm586 = vcmask 261120
      %v588 = vsel %vm586, %v583, 0
      %590 = vmatpush.bf16.msra.mxu0 %v444
      %591 = vmatpush.bf16.msra.mxu0 %v442
      %592 = vmatpush.bf16.msra.mxu0 %v421
      %593 = vmatpush.bf16.msra.mxu0 %v419
      %594 = vmatpush.bf16.msra.mxu0 %v398
      %595 = vmatpush.bf16.msra.mxu0 %v396
      %596 = vmatpush.bf16.msra.mxu0 %v374
      %597 = vmatpush.bf16.msra.mxu0 %v371
      %598 = vmatmul.bf16.gmra.mxu0 %v581
      %v599 = vpop.f32.mrf.mxu0
      %v600 = vadd.f32 0.0, %v599
      %v601 = vpop.f32.mrf.mxu0
      %v602 = vadd.f32 0.0, %v601
      %603 = vdwg.mxu0
      %604 = vmatpush.bf16.msra.mxu0 %v536
      %605 = vmatpush.bf16.msra.mxu0 %v534
      %606 = vmatpush.bf16.msra.mxu0 %v513
      %607 = vmatpush.bf16.msra.mxu0 %v511
      %608 = vmatpush.bf16.msra.mxu0 %v490
      %609 = vmatpush.bf16.msra.mxu0 %v488
      %610 = vmatpush.bf16.msra.mxu0 %v467
      %611 = vmatpush.bf16.msra.mxu0 %v465
      %612 = vmatmul.bf16.gmra.mxu0 %v582
      %v613 = vpop.f32.mrf.mxu0
      %v614 = vadd.f32 %v600, %v613
      %v615 = vpop.f32.mrf.mxu0
      %v616 = vadd.f32 %v602, %v615
      %617 = vdwg.mxu0
      %618 = vmatpush.bf16.msra.mxu0 0
      %619 = vmatpush.bf16.msra.mxu0 0
      %620 = vmatpush.bf16.msra.mxu0 0
      %621 = vmatpush.bf16.msra.mxu0 0
      %622 = vmatpush.bf16.msra.mxu0 0
      %623 = vmatpush.bf16.msra.mxu0 0
      %624 = vmatpush.bf16.msra.mxu0 %v559
      %625 = vmatpush.bf16.msra.mxu0 %v557
      %626 = vmatmul.bf16.gmra.mxu0 %v588
      %v627 = vpop.f32.mrf.mxu0
      %v628 = vadd.f32 %v614, %v627
      %v629 = vpop.f32.mrf.mxu0
      %v630 = vadd.f32 %v616, %v629
      %631 = vdwg.mxu0
      %632 = vmatpush.bf16.msra.mxu0 %v445
      %633 = vmatpush.bf16.msra.mxu0 %v443
      %634 = vmatpush.bf16.msra.mxu0 %v422
      %635 = vmatpush.bf16.msra.mxu0 %v420
      %636 = vmatpush.bf16.msra.mxu0 %v399
      %637 = vmatpush.bf16.msra.mxu0 %v397
      %638 = vmatpush.bf16.msra.mxu0 %v375
      %639 = vmatpush.bf16.msra.mxu0 %v372
      %640 = vmatmul.bf16.gmra.mxu0 %v581
      %v641 = vpop.f32.mrf.mxu0
      %v642 = vadd.f32 0.0, %v641
      %v643 = vpop.f32.mrf.mxu0
      %v644 = vadd.f32 0.0, %v643
      %645 = vdwg.mxu0
      %646 = vmatpush.bf16.msra.mxu0 %v537
      %647 = vmatpush.bf16.msra.mxu0 %v535
      %648 = vmatpush.bf16.msra.mxu0 %v514
      %649 = vmatpush.bf16.msra.mxu0 %v512
      %650 = vmatpush.bf16.msra.mxu0 %v491
      %651 = vmatpush.bf16.msra.mxu0 %v489
      %652 = vmatpush.bf16.msra.mxu0 %v468
      %653 = vmatpush.bf16.msra.mxu0 %v466
      %654 = vmatmul.bf16.gmra.mxu0 %v582
      %v655 = vpop.f32.mrf.mxu0
      %v656 = vadd.f32 %v642, %v655
      %v657 = vpop.f32.mrf.mxu0
      %v658 = vadd.f32 %v644, %v657
      %659 = vdwg.mxu0
      %660 = vmatpush.bf16.msra.mxu0 0
      %661 = vmatpush.bf16.msra.mxu0 0
      %662 = vmatpush.bf16.msra.mxu0 0
      %663 = vmatpush.bf16.msra.mxu0 0
      %664 = vmatpush.bf16.msra.mxu0 0
      %665 = vmatpush.bf16.msra.mxu0 0
      %666 = vmatpush.bf16.msra.mxu0 %v560
      %667 = vmatpush.bf16.msra.mxu0 %v558
      %668 = vmatmul.bf16.gmra.mxu0 %v588
      %v669 = vpop.f32.mrf.mxu0
      %v670 = vadd.f32 %v656, %v669
      %v671 = vpop.f32.mrf.mxu0
      %v672 = vadd.f32 %v658, %v671
      %673 = vdwg.mxu0
      %674 = vmatpush.bf16.msra.mxu0 %v440
      %675 = vmatpush.bf16.msra.mxu0 %v434
      %676 = vmatpush.bf16.msra.mxu0 %v417
      %677 = vmatpush.bf16.msra.mxu0 %v411
      %678 = vmatpush.bf16.msra.mxu0 %v394
      %679 = vmatpush.bf16.msra.mxu0 %v388
      %680 = vmatpush.bf16.msra.mxu0 %v376
      %681 = vmatpush.bf16.msra.mxu0 %v373
      %682 = vmatmul.bf16.gmra.mxu0 %v581
      %v683 = vpop.f32.mrf.mxu0
      %v684 = vadd.f32 0.0, %v683
      %v685 = vpop.f32.mrf.mxu0
      %v686 = vadd.f32 0.0, %v685
      %687 = vdwg.mxu0
      %688 = vmatpush.bf16.msra.mxu0 %v532
      %689 = vmatpush.bf16.msra.mxu0 %v526
      %690 = vmatpush.bf16.msra.mxu0 %v509
      %691 = vmatpush.bf16.msra.mxu0 %v503
      %692 = vmatpush.bf16.msra.mxu0 %v486
      %693 = vmatpush.bf16.msra.mxu0 %v480
      %694 = vmatpush.bf16.msra.mxu0 %v463
      %695 = vmatpush.bf16.msra.mxu0 %v457
      %696 = vmatmul.bf16.gmra.mxu0 %v582
      %v697 = vpop.f32.mrf.mxu0
      %v698 = vadd.f32 %v684, %v697
      %v699 = vpop.f32.mrf.mxu0
      %v700 = vadd.f32 %v686, %v699
      %701 = vdwg.mxu0
      %702 = vmatpush.bf16.msra.mxu0 0
      %703 = vmatpush.bf16.msra.mxu0 0
      %704 = vmatpush.bf16.msra.mxu0 0
      %705 = vmatpush.bf16.msra.mxu0 0
      %706 = vmatpush.bf16.msra.mxu0 0
      %707 = vmatpush.bf16.msra.mxu0 0
      %708 = vmatpush.bf16.msra.mxu0 %v555
      %709 = vmatpush.bf16.msra.mxu0 %v549
      %710 = vmatmul.bf16.gmra.mxu0 %v588
      %v711 = vpop.f32.mrf.mxu0
      %v712 = vadd.f32 %v698, %v711
      %v713 = vpop.f32.mrf.mxu0
      %v714 = vadd.f32 %v700, %v713
      %715 = vdwg.mxu0
      %v716 = vld [vmem:[%s3] sm:$0xff]
      %v717 = vld [vmem:[%s3 + $0x8] sm:$0xff]
      %719 = vset.pattern.permute.xlu0 0
      %720 = vperm.xlu0 %719, %v716
      %v721 = vpop.permute.xlu0 %720
      %724 = vset.pattern.permute.xlu0 0
      %725 = vperm.xlu0 %724, %v717
      %v726 = vpop.permute.xlu0 %725
      %v728 = vmul.f32 %v628, %v721
      %v729 = vmul.f32 %v670, %v721
      %v730 = vmul.f32 %v712, %v721
      %v731 = vmul.f32 %v630, %v726
      %v732 = vmul.f32 %v672, %v726
      %v733 = vmul.f32 %v714, %v726
      %v734 = vld [vmem:[%s4] sm:$0xff]
      %v735 = vld [vmem:[%s4 + $0x8] sm:$0xff]
      %737 = vset.pattern.permute.xlu0 0
      %738 = vperm.xlu0 %737, %v734
      %v739 = vpop.permute.xlu0 %738
      %742 = vset.pattern.permute.xlu0 0
      %743 = vperm.xlu0 %742, %v735
      %v744 = vpop.permute.xlu0 %743
      %v746 = vadd.f32 %v728, %v739
      %v747 = vadd.f32 %v729, %v739
      %v748 = vadd.f32 %v730, %v739
      %v749 = vadd.f32 %v731, %v744
      %v750 = vadd.f32 %v732, %v744
      %v751 = vadd.f32 %v733, %v744
      %v752 = vmul.f32 %v746, 0.01
      %v753 = vmul.f32 %v747, 0.01
      %v754 = vmul.f32 %v748, 0.01
      %v755 = vmul.f32 %v749, 0.01
      %v756 = vmul.f32 %v750, 0.01
      %v757 = vmul.f32 %v751, 0.01
      %v758 = vmax.f32 %v746, %v752
      %v759 = vmax.f32 %v747, %v753
      %v760 = vmax.f32 %v748, %v754
      %v761 = vmax.f32 %v749, %v755
      %v762 = vmax.f32 %v750, %v756
      %v763 = vmax.f32 %v751, %v757
      %v764 = vlaneseq
      %v765 = vand.u32 %v764, 127
      %v766 = vadd.s32 %v765, 128
      %v767 = vadd.s32 %v765, 256
      %s768 = smul.u32 %s24, 16
      %s769 = ssub.s32 1, %s768
      %p770 = scmp.gt.s32.totalorder %s769, 0
      %s771 = scalar_select %p770, %s769, 0
      %s772 = smul.u32 %s771, 18
      %s773 = ssub.s32 17, %s768
      %p774 = scmp.lt.s32.totalorder %s773, 18
      %s775 = scalar_select %p774, %s773, 18
      %s776 = smul.u32 %s775, 18
      %v777 = vstv %s772
      %vm778 = vcmp.ge.s32.totalorder %v765, %v777
      %vm779 = vcmp.ge.s32.totalorder %v766, %v777
      %vm780 = vcmp.ge.s32.totalorder %v767, %v777
      %v781 = vstv %s776
      %vm782 = vcmp.lt.s32.totalorder %v765, %v781
      %vm783 = vcmp.lt.s32.totalorder %v766, %v781
      %vm784 = vcmp.lt.s32.totalorder %v767, %v781
      %vm785 = vmand %vm778, %vm782
      %vm786 = vmand %vm779, %vm783
      %vm787 = vmand %vm780, %vm784
      %v788 = vsel %vm785, 1, 0
      %v789 = vsel %vm786, 1, 0
      %v790 = vsel %vm787, 1, 0
      %vm791 = vcmp.eq.s32.totalorder %v788, 1
      %vm792 = vcmp.eq.s32.totalorder %v789, 1
      %vm793 = vcmp.eq.s32.totalorder %v790, 1
      %v794 = vsel %vm791, %v758, 0.0
      %v795 = vsel %vm792, %v759, 0.0
      %v796 = vsel %vm793, %v760, 0.0
      %v797 = vsel %vm791, %v761, 0.0
      %v798 = vsel %vm792, %v762, 0.0
      %v799 = vsel %vm793, %v763, 0.0
      %v800 = vld [vmem:[%s1] sm:$0x7]
      %v802 = vperm.slane %v800, 0
      %v803 = vperm.slane %v800, 1
      %v804 = vperm.slane %v800, 2
      %v808 = vmul.f32 %v794, %v802
      %v809 = vmul.f32 %v795, %v803
      %v810 = vmul.f32 %v796, %v804
      %v811 = vmul.f32 %v797, %v802
      %v812 = vmul.f32 %v798, %v803
      %v813 = vmul.f32 %v799, %v804
      %v814 = vpack.c.bf16 %v809, %v808
      %v815 = vpack.c.bf16 %v810, %v810
      %v816 = vpack.c.bf16 %v812, %v811
      %v817 = vpack.c.bf16 %v813, %v813
      %v822 = vunpack.c.l.b16 %v814
      %v823 = vunpack.c.h.b16 %v814
      %v824 = vunpack.c.l.b16 %v815
      %v825 = vunpack.c.l.b16 %v816
      %v826 = vunpack.c.h.b16 %v816
      %v827 = vunpack.c.l.b16 %v817
      %v828 = vpack.c.b16 %v825, %v822
      %v829 = vpack.c.b16 %v826, %v823
      %v830 = vpack.c.b16 %v827, %v824
      %831 = vrot.lane.b32.xlu0 %v828, 1
      %v832 = vpop.permute.xlu0 %831
      %833 = vrot.lane.b32.xlu0 %v829, 1
      %v834 = vpop.permute.xlu0 %833
      %835 = vrot.lane.b32.xlu0 %v830, 1
      %v836 = vpop.permute.xlu0 %835
      %vm837 = vcmask 7168
      %v838 = vsel %vm837, %v832, %v834
      %v839 = vsel %vm837, %v834, %v836
      %vm841 = vcmask 7168
      %v844 = vsel %vm841, 0, %v832
      %vm846 = vcmask 564224
      %v848 = vsel %vm846, %v839, 0
      %852 = vrot.lane.b32.xlu0 %v844, 127
      %v853 = vpop.permute.xlu0 %852
      %854 = vrot.lane.b32.xlu0 %v838, 127
      %v855 = vpop.permute.xlu0 %854
      %856 = vrot.lane.b32.xlu0 %v848, 127
      %v857 = vpop.permute.xlu0 %856
      %v858 = vsel %vm395, %v853, %v855
      %v859 = vsel %vm395, %v855, %v857
      %863 = vrot.lane.b32.xlu0 %v844, 126
      %v864 = vpop.permute.xlu0 %863
      %865 = vrot.lane.b32.xlu0 %v838, 126
      %v866 = vpop.permute.xlu0 %865
      %867 = vrot.lane.b32.xlu0 %v848, 126
      %v868 = vpop.permute.xlu0 %867
      %v869 = vsel %vm418, %v864, %v866
      %v870 = vsel %vm418, %v866, %v868
      %874 = vrot.lane.b32.xlu0 %v844, 110
      %v875 = vpop.permute.xlu0 %874
      %876 = vrot.lane.b32.xlu0 %v838, 110
      %v877 = vpop.permute.xlu0 %876
      %878 = vrot.lane.b32.xlu0 %v848, 110
      %v879 = vpop.permute.xlu0 %878
      %v880 = vsel %vm441, %v875, %v877
      %v881 = vsel %vm441, %v877, %v879
      %885 = vrot.lane.b32.xlu0 %v844, 109
      %v886 = vpop.permute.xlu0 %885
      %887 = vrot.lane.b32.xlu0 %v838, 109
      %v888 = vpop.permute.xlu0 %887
      %889 = vrot.lane.b32.xlu0 %v848, 109
      %v890 = vpop.permute.xlu0 %889
      %v891 = vsel %vm464, %v886, %v888
      %v892 = vsel %vm464, %v888, %v890
      %896 = vrot.lane.b32.xlu0 %v844, 108
      %v897 = vpop.permute.xlu0 %896
      %898 = vrot.lane.b32.xlu0 %v838, 108
      %v899 = vpop.permute.xlu0 %898
      %900 = vrot.lane.b32.xlu0 %v848, 108
      %v901 = vpop.permute.xlu0 %900
      %v902 = vsel %vm487, %v897, %v899
      %v903 = vsel %vm487, %v899, %v901
      %907 = vrot.lane.b32.xlu0 %v844, 92
      %v908 = vpop.permute.xlu0 %907
      %909 = vrot.lane.b32.xlu0 %v838, 92
      %v910 = vpop.permute.xlu0 %909
      %911 = vrot.lane.b32.xlu0 %v848, 92
      %v912 = vpop.permute.xlu0 %911
      %v913 = vsel %vm510, %v908, %v910
      %v914 = vsel %vm510, %v910, %v912
      %918 = vrot.lane.b32.xlu0 %v844, 91
      %v919 = vpop.permute.xlu0 %918
      %920 = vrot.lane.b32.xlu0 %v838, 91
      %v921 = vpop.permute.xlu0 %920
      %922 = vrot.lane.b32.xlu0 %v848, 91
      %v923 = vpop.permute.xlu0 %922
      %v924 = vsel %vm533, %v919, %v921
      %v925 = vsel %vm533, %v921, %v923
      %929 = vrot.lane.b32.xlu0 %v844, 90
      %v930 = vpop.permute.xlu0 %929
      %931 = vrot.lane.b32.xlu0 %v838, 90
      %v932 = vpop.permute.xlu0 %931
      %933 = vrot.lane.b32.xlu0 %v848, 90
      %v934 = vpop.permute.xlu0 %933
      %v935 = vsel %vm556, %v930, %v932
      %v936 = vsel %vm556, %v932, %v934
      %v940 = vld [vmem:[%s5] sm:$0xff]
      %v941 = vld [vmem:[%s5 + $0x8] sm:$0xff]
      %v944 = vunpack.c.l.b16 %v940
      %v945 = vunpack.c.h.b16 %v940
      %v946 = vunpack.c.l.b16 %v941
      %v947 = vunpack.c.h.b16 %v941
      %v948 = vpack.c.b16 %v946, %v944
      %v949 = vpack.c.b16 %v947, %v945
      %vm951 = vcmask 130048
      %v953 = vsel %vm951, %v949, 0
      %955 = vmatpush.bf16.msra.mxu0 %v924
      %956 = vmatpush.bf16.msra.mxu0 %v913
      %957 = vmatpush.bf16.msra.mxu0 %v902
      %958 = vmatpush.bf16.msra.mxu0 %v891
      %959 = vmatpush.bf16.msra.mxu0 %v880
      %960 = vmatpush.bf16.msra.mxu0 %v869
      %961 = vmatpush.bf16.msra.mxu0 %v858
      %962 = vmatpush.bf16.msra.mxu0 %v844
      %963 = vmatmul.bf16.gmra.mxu0 %v948
      %v964 = vpop.f32.mrf.mxu0
      %v965 = vadd.f32 0.0, %v964
      %v966 = vpop.f32.mrf.mxu0
      %v967 = vadd.f32 0.0, %v966
      %968 = vdwg.mxu0
      %969 = vmatpush.bf16.msra.mxu0 0
      %970 = vmatpush.bf16.msra.mxu0 0
      %971 = vmatpush.bf16.msra.mxu0 0
      %972 = vmatpush.bf16.msra.mxu0 0
      %973 = vmatpush.bf16.msra.mxu0 0
      %974 = vmatpush.bf16.msra.mxu0 0
      %975 = vmatpush.bf16.msra.mxu0 0
      %976 = vmatpush.bf16.msra.mxu0 %v935
      %977 = vmatmul.bf16.gmra.mxu0 %v953
      %v978 = vpop.f32.mrf.mxu0
      %v979 = vadd.f32 %v965, %v978
      %v980 = vpop.f32.mrf.mxu0
      %v981 = vadd.f32 %v967, %v980
      %982 = vdwg.mxu0
      %983 = vmatpush.bf16.msra.mxu0 %v925
      %984 = vmatpush.bf16.msra.mxu0 %v914
      %985 = vmatpush.bf16.msra.mxu0 %v903
      %986 = vmatpush.bf16.msra.mxu0 %v892
      %987 = vmatpush.bf16.msra.mxu0 %v881
      %988 = vmatpush.bf16.msra.mxu0 %v870
      %989 = vmatpush.bf16.msra.mxu0 %v859
      %990 = vmatpush.bf16.msra.mxu0 %v838
      %991 = vmatmul.bf16.gmra.mxu0 %v948
      %v992 = vpop.f32.mrf.mxu0
      %v993 = vadd.f32 0.0, %v992
      %v994 = vpop.f32.mrf.mxu0
      %v995 = vadd.f32 0.0, %v994
      %996 = vdwg.mxu0
      %997 = vmatpush.bf16.msra.mxu0 0
      %998 = vmatpush.bf16.msra.mxu0 0
      %999 = vmatpush.bf16.msra.mxu0 0
      %1000 = vmatpush.bf16.msra.mxu0 0
      %1001 = vmatpush.bf16.msra.mxu0 0
      %1002 = vmatpush.bf16.msra.mxu0 0
      %1003 = vmatpush.bf16.msra.mxu0 0
      %1004 = vmatpush.bf16.msra.mxu0 %v936
      %1005 = vmatmul.bf16.gmra.mxu0 %v953
      %v1006 = vpop.f32.mrf.mxu0
      %v1007 = vadd.f32 %v993, %v1006
      %v1008 = vpop.f32.mrf.mxu0
      %v1009 = vadd.f32 %v995, %v1008
      %1010 = vdwg.mxu0
      %1011 = vmatpush.bf16.msra.mxu0 %v923
      %1012 = vmatpush.bf16.msra.mxu0 %v912
      %1013 = vmatpush.bf16.msra.mxu0 %v901
      %1014 = vmatpush.bf16.msra.mxu0 %v890
      %1015 = vmatpush.bf16.msra.mxu0 %v879
      %1016 = vmatpush.bf16.msra.mxu0 %v868
      %1017 = vmatpush.bf16.msra.mxu0 %v857
      %1018 = vmatpush.bf16.msra.mxu0 %v848
      %1019 = vmatmul.bf16.gmra.mxu0 %v948
      %v1020 = vpop.f32.mrf.mxu0
      %v1021 = vadd.f32 0.0, %v1020
      %v1022 = vpop.f32.mrf.mxu0
      %v1023 = vadd.f32 0.0, %v1022
      %1024 = vdwg.mxu0
      %1025 = vmatpush.bf16.msra.mxu0 0
      %1026 = vmatpush.bf16.msra.mxu0 0
      %1027 = vmatpush.bf16.msra.mxu0 0
      %1028 = vmatpush.bf16.msra.mxu0 0
      %1029 = vmatpush.bf16.msra.mxu0 0
      %1030 = vmatpush.bf16.msra.mxu0 0
      %1031 = vmatpush.bf16.msra.mxu0 0
      %1032 = vmatpush.bf16.msra.mxu0 %v934
      %1033 = vmatmul.bf16.gmra.mxu0 %v953
      %v1034 = vpop.f32.mrf.mxu0
      %v1035 = vadd.f32 %v1021, %v1034
      %v1036 = vpop.f32.mrf.mxu0
      %v1037 = vadd.f32 %v1023, %v1036
      %1038 = vdwg.mxu0
      %v1039 = vld [vmem:[%s6] sm:$0xff]
      %v1040 = vld [vmem:[%s6 + $0x8] sm:$0xff]
      %1042 = vset.pattern.permute.xlu0 0
      %1043 = vperm.xlu0 %1042, %v1039
      %v1044 = vpop.permute.xlu0 %1043
      %1047 = vset.pattern.permute.xlu0 0
      %1048 = vperm.xlu0 %1047, %v1040
      %v1049 = vpop.permute.xlu0 %1048
      %v1051 = vmul.f32 %v979, %v1044
      %v1052 = vmul.f32 %v1007, %v1044
      %v1053 = vmul.f32 %v1035, %v1044
      %v1054 = vmul.f32 %v981, %v1049
      %v1055 = vmul.f32 %v1009, %v1049
      %v1056 = vmul.f32 %v1037, %v1049
      %v1057 = vld [vmem:[%s7] sm:$0xff]
      %v1058 = vld [vmem:[%s7 + $0x8] sm:$0xff]
      %1060 = vset.pattern.permute.xlu0 0
      %1061 = vperm.xlu0 %1060, %v1057
      %v1062 = vpop.permute.xlu0 %1061
      %1065 = vset.pattern.permute.xlu0 0
      %1066 = vperm.xlu0 %1065, %v1058
      %v1067 = vpop.permute.xlu0 %1066
      %v1069 = vadd.f32 %v1051, %v1062
      %v1070 = vadd.f32 %v1052, %v1062
      %v1071 = vadd.f32 %v1053, %v1062
      %v1072 = vadd.f32 %v1054, %v1067
      %v1073 = vadd.f32 %v1055, %v1067
      %v1074 = vadd.f32 %v1056, %v1067
      %v1075 = vmul.f32 %v1069, 0.01
      %v1076 = vmul.f32 %v1070, 0.01
      %v1077 = vmul.f32 %v1071, 0.01
      %v1078 = vmul.f32 %v1072, 0.01
      %v1079 = vmul.f32 %v1073, 0.01
      %v1080 = vmul.f32 %v1074, 0.01
      %v1081 = vmax.f32 %v1069, %v1075
      %v1082 = vmax.f32 %v1070, %v1076
      %v1083 = vmax.f32 %v1071, %v1077
      %v1084 = vmax.f32 %v1072, %v1078
      %v1085 = vmax.f32 %v1073, %v1079
      %v1086 = vmax.f32 %v1074, %v1080
      %1087 = vst [vmem:[%s341] sm:$0xff] %v1081
      %1088 = vst [vmem:[%s341 + $0x8] sm:$0xff] %v1082
      %1089 = vst.msk [vmem:[%s341 + $0x10] sm:$0xff] %vm586, %v1083
      %1090 = vst [vmem:[%s341 + $0x18] sm:$0xff] %v1084
      %1091 = vst [vmem:[%s341 + $0x20] sm:$0xff] %v1085
      %1092 = vst.msk [vmem:[%s341 + $0x28] sm:$0xff] %vm586, %v1086
      %p1093 = scmp.lt.s32.totalorder %s23, 1
      %s1094 = scalar_select %p1093, %s23, 1
      %p1095 = scmp.lt.s32.totalorder %s24, 0
      %s1096 = scalar_select %p1095, %s24, 0
      %s1097 = smul.addr %s1096, 6
      %s1098 = smul.addr %s1094, 6
      %s1099 = sadd.s32 %s1097, %s1098
      %s1100 = smul.addr %s1099, 8
      %s1101 = scalar_lea.vmem %s8, %s1100
      // Predicated region
      $region53: #{up_block_unet_forward.1} parent=51 // pred_check
        %p1102 = pneg %p226
      $region54: #{up_block_unet_forward.1} parent=51 // pred_check_branch
        %1104 = sbr.rel (%p1102) target = $region56
      $region55: #{up_block_unet_forward.1} parent=51 // pred_region
        _
      $region56: #{up_block_unet_forward.1} parent=51 // pred_fallthru
        _
    $region52: #{up_block_unet_forward.1} parent=5 // pred_fallthru
      _
    %p1105 = scmp.le.s32.totalorder 2, %s14
    // Predicated region
    $region57: #{up_block_unet_forward.1} parent=5 // pred_check
      %p1106 = pneg %p1105
    $region58: #{up_block_unet_forward.1} parent=5 // pred_check_branch
      %1108 = sbr.rel (%p1106) target = $region60
    $region59: #{up_block_unet_forward.1} parent=5 // pred_region
      %s1109 = ssub.s32 %s14, 2
      // Predicated region
      $region61: #{up_block_unet_forward.1} parent=59 // pred_check
        %p1110 = pneg %p232
      $region62: #{up_block_unet_forward.1} parent=59 // pred_check_branch
        %1112 = sbr.rel (%p1110) target = $region64
      $region63: #{up_block_unet_forward.1} parent=59 // pred_region
        %p1113 = scmp.lt.s32.totalorder %s25, 1
        %s1114 = scalar_select %p1113, %s25, 1
        %p1115 = scmp.lt.s32.totalorder %s26, 0
        %s1116 = scalar_select %p1115, %s26, 0
        %s1117 = smul.addr %s1116, 6
        %s1118 = smul.addr %s1114, 6
        %s1119 = sadd.s32 %s1117, %s1118
        %s1120 = smul.addr %s1119, 8
        %s1121 = scalar_lea.vmem %s8, %s1120
      $region64: #{up_block_unet_forward.1} parent=59 // pred_fallthru
        _
    $region60: #{up_block_unet_forward.1} parent=5 // pred_fallthru
      _
  $region6: #{up_block_unet_forward.1} parent=0 // loop_footer
    %s18 = sadd.s32 1, %s14
  $region7: #{up_block_unet_forward.1} parent=0 // loop_footer_branch
    %13 = sbr.rel target = $region3
  $region8: #{up_block_unet_forward.1} parent=0 // loop_exit
    _

</llo_original>
